<compile_context>
chip_gen: v7x
topology: tpu7x:2x2x1
jax: 0.10.0
libtpu: 0.0.40
codegen_flags: <defaults>
</compile_context>

<pallas_src>
import jax
import jax.numpy as jnp
from jax import lax
from jax.experimental import pallas as pl
from jax.experimental.pallas import tpu as pltpu


def _round_up(x, m):
    return (x + m - 1) // m * m


def _struct_decoder_kernel(x_ref, wl_ref, bl_ref, wa_ref, node_ref, edge_ref):
    # x_ref:    (TB, N, H)   bf16 batch-tile of node features
    # wl_ref:   (H, Cp)      bf16 label weight (lane-padded to Cp, multiple of 128)
    # bl_ref:   (1, Cp)      f32  label bias (padded)
    # wa_ref:   (H, H)       bf16 arc (bilinear) weight
    # node_ref: (TB, N, Cp)  f32  node-label logits (padded)
    # edge_ref: (TB, N, N)   f32  edge / arc scores
    TB, N, H = x_ref.shape
    Cp = wl_ref.shape[1]

    x = x_ref[...]                                   # (TB, N, H) bf16

    # ---- node label head: flatten batch*node rows -> MXU M dim = TB*N ----
    x2d = x.reshape(TB * N, H)
    node = jnp.dot(x2d, wl_ref[...], preferred_element_type=jnp.float32)
    node = node + bl_ref[...]                        # broadcast (1, Cp) over rows
    node_ref[...] = node.reshape(TB, N, Cp).astype(node_ref.dtype)

    # ---- edge / arc head: edge[b] = (x[b] @ Wa) @ x[b]^T, no explicit transpose ----
    arc = lax.dot_general(
        x, wa_ref[...],
        dimension_numbers=(((2,), (0,)), ((), ())),
        preferred_element_type=jnp.float32)          # (TB, N, H) f32
    edge = lax.dot_general(
        arc.astype(x.dtype), x,                      # contract H of both; batch over TB
        dimension_numbers=(((2,), (2,)), ((0,), (0,))),
        preferred_element_type=jnp.float32)          # (TB, N, N) f32
    edge_ref[...] = edge.astype(edge_ref.dtype)


def struct_decoder_forward(node_features, w_label, b_label, w_arc,
                           *, batch_tile=None, compute_dtype=jnp.bfloat16):
    """node_features: [B, N, H] -> (node_logits [B, N, C], edge_scores [B, N, N])."""
    B, N, H = node_features.shape
    C = w_label.shape[1]

    # Lane-dense label head: pad C up to a multiple of 128, slice outside.
    Cp = max(128, _round_up(C, 128))
    wl_p = jnp.zeros((H, Cp), compute_dtype).at[:, :C].set(w_label.astype(compute_dtype))
    bl_p = jnp.zeros((1, Cp), jnp.float32).at[:, :C].set(
        b_label.astype(jnp.float32).reshape(1, C))

    x_c = node_features.astype(compute_dtype)
    wa_c = w_arc.astype(compute_dtype)

    # Pick a batch tile: amortize per-grid-step overhead (target TB*N >= 256)
    # while keeping the double-buffered working set inside a conservative VMEM
    # budget that fits v5e/v6e/v7x.
    if batch_tile is None:
        isz = jnp.dtype(compute_dtype).itemsize

        def ws_bytes(tb):
            x_b = tb * N * H * isz
            node_b = tb * N * Cp * 4
            edge_b = tb * N * N * 4
            w_b = H * Cp * isz + H * H * isz + Cp * 4
            return 2 * (x_b + node_b + edge_b) + 2 * w_b  # 2-deep pipelining

        budget = 40 * 1024 * 1024
        batch_tile = 1
        for cand in range(1, B + 1):
            if B % cand == 0 and ws_bytes(cand) <= budget:
                batch_tile = cand
                if cand * N >= 256:
                    break
    TB = batch_tile
    assert B % TB == 0, "batch_tile must divide the batch size"

    out_shapes = (
        jax.ShapeDtypeStruct((B, N, Cp), jnp.float32),
        jax.ShapeDtypeStruct((B, N, N), jnp.float32),
    )

    grid_spec = pl.GridSpec(
        grid=(B // TB,),
        in_specs=[
            pl.BlockSpec((TB, N, H), lambda b: (b, 0, 0)),   # node_features tile
            pl.BlockSpec((H, Cp), lambda b: (0, 0)),          # w_label (resident: const index)
            pl.BlockSpec((1, Cp), lambda b: (0, 0)),          # b_label (resident)
            pl.BlockSpec((H, H), lambda b: (0, 0)),           # w_arc   (resident)
        ],
        out_specs=[
            pl.BlockSpec((TB, N, Cp), lambda b: (b, 0, 0)),   # node logits (padded)
            pl.BlockSpec((TB, N, N), lambda b: (b, 0, 0)),    # edge scores
        ],
    )

    node_padded, edge_scores = pl.pallas_call(
        _struct_decoder_kernel,
        out_shape=out_shapes,
        grid_spec=grid_spec,
        compiler_params=pltpu.CompilerParams(
            dimension_semantics=("parallel",),        # shards batch tiles across v7x TCs
            vmem_limit_bytes=48 * 1024 * 1024,        # explicit: v5e default is only 16 MiB
        ),
    )(x_c, wl_p, bl_p, wa_c)

    return node_padded[:, :, :C], edge_scores


if __name__ == "__main__":
    # Small, deterministic shapes consistent with the module's contract.
    B, N, H, C = 2, 8, 32, 16

    key = jax.random.PRNGKey(0)
    k_x, k_wl, k_bl, k_wa = jax.random.split(key, 4)

    node_features = jax.random.normal(k_x, (B, N, H), dtype=jnp.float32)
    # Deterministic in-script parameter init (no checkpoint load).
    w_label = jax.random.normal(k_wl, (H, C), dtype=jnp.float32) * 0.05
    b_label = jax.random.normal(k_bl, (1, C), dtype=jnp.float32) * 0.05
    w_arc = jax.random.normal(k_wa, (H, H), dtype=jnp.float32) * 0.05

    node_logits, edge_scores = struct_decoder_forward(
        node_features, w_label, b_label, w_arc
    )
    jax.block_until_ready((node_logits, edge_scores))

    # Pure-JAX reference mirroring the kernel's numerics
    # (bf16 MXU inputs, f32 accumulation, bf16 recast of the arc intermediate).
    xb = node_features.astype(jnp.bfloat16).astype(jnp.float32)
    wlb = w_label.astype(jnp.bfloat16).astype(jnp.float32)
    wab = w_arc.astype(jnp.bfloat16).astype(jnp.float32)
    ref_node = jnp.einsum("bnh,hc->bnc", xb, wlb, precision="highest") + b_label[None]
    ref_arc = jnp.einsum("bnh,hk->bnk", xb, wab, precision="highest")
    ref_arc_b = ref_arc.astype(jnp.bfloat16).astype(jnp.float32)
    ref_edge = jnp.einsum("bnk,bmk->bnm", ref_arc_b, xb, precision="highest")

    assert node_logits.shape == (B, N, C)
    assert edge_scores.shape == (B, N, N)
    assert jnp.allclose(node_logits, ref_node, atol=1e-3, rtol=1e-3)
    assert jnp.allclose(edge_scores, ref_edge, atol=1e-3, rtol=1e-3)

    print("KERNEL_OK")
</pallas_src>

<mosaic_0001>
module attributes {stable_mosaic.version = 11 : i64} {
  func.func @_struct_decoder_kernel(%arg0: i32, %arg1: memref<2x8x32xbf16, #tpu.memory_space<vmem>>, %arg2: memref<32x128xbf16, #tpu.memory_space<vmem>>, %arg3: memref<1x128xf32, #tpu.memory_space<vmem>>, %arg4: memref<32x32xbf16, #tpu.memory_space<vmem>>, %arg5: memref<2x8x128xf32, #tpu.memory_space<vmem>>, %arg6: memref<2x8x8xf32, #tpu.memory_space<vmem>>) attributes {dimension_semantics = [#tpu.dimension_semantics<parallel>], iteration_bounds = array<i64: 1>, scalar_prefetch = 0 : i64, scratch_operands = 0 : i64, tpu.core_type = #tpu.core_type<tc>, window_params = [{transform_indices = @transform_0, window_bounds = array<i64: 2, 8, 32>}, {pipeline_mode = #tpu.pipeline_mode<synchronous>, transform_indices = @transform_1, window_bounds = array<i64: 32, 128>}, {pipeline_mode = #tpu.pipeline_mode<synchronous>, transform_indices = @transform_2, window_bounds = array<i64: 1, 128>}, {pipeline_mode = #tpu.pipeline_mode<synchronous>, transform_indices = @transform_3, window_bounds = array<i64: 32, 32>}, {transform_indices = @transform_4, window_bounds = array<i64: 2, 8, 128>}, {transform_indices = @transform_5, window_bounds = array<i64: 2, 8, 8>}]} {
    %c0 = arith.constant 0 : index
    %c0_0 = arith.constant 0 : index
    %c0_1 = arith.constant 0 : index
    %0 = vector.load %arg1[%c0, %c0_0, %c0_1] : memref<2x8x32xbf16, #tpu.memory_space<vmem>>, vector<2x8x32xbf16>
    %1 = vector.shape_cast %0 : vector<2x8x32xbf16> to vector<16x32xbf16>
    %c0_2 = arith.constant 0 : index
    %c0_3 = arith.constant 0 : index
    %2 = vector.load %arg2[%c0_2, %c0_3] : memref<32x128xbf16, #tpu.memory_space<vmem>>, vector<32x128xbf16>
    %cst = arith.constant dense<0.000000e+00> : vector<16x128xf32>
    %3 = tpu.matmul %1, %2, %cst {dimension_numbers = #tpu.dot_dimension_numbers<[1], [0], [0], [1], [0, 0, 1, 1], [], []>} : vector<16x32xbf16>, vector<32x128xbf16>, vector<16x128xf32> -> vector<16x128xf32>
    %c0_4 = arith.constant 0 : index
    %c0_5 = arith.constant 0 : index
    %4 = vector.load %arg3[%c0_4, %c0_5] : memref<1x128xf32, #tpu.memory_space<vmem>>, vector<1x128xf32>
    %5 = vector.broadcast %4 : vector<1x128xf32> to vector<16x128xf32>
    %6 = arith.addf %3, %5 : vector<16x128xf32>
    %7 = vector.shape_cast %6 : vector<16x128xf32> to vector<2x8x128xf32>
    %c0_6 = arith.constant 0 : index
    %c0_7 = arith.constant 0 : index
    %c0_8 = arith.constant 0 : index
    %8 = vector.load %arg5[%c0_6, %c0_7, %c0_8] : memref<2x8x128xf32, #tpu.memory_space<vmem>>, vector<2x8x128xf32>
    tpu.vector_store %arg5[%c0_6, %c0_7, %c0_8], %7 {strides = array<i32>} : memref<2x8x128xf32, #tpu.memory_space<vmem>>, vector<2x8x128xf32>,
    %c0_9 = arith.constant 0 : index
    %c0_10 = arith.constant 0 : index
    %9 = vector.load %arg4[%c0_9, %c0_10] : memref<32x32xbf16, #tpu.memory_space<vmem>>, vector<32x32xbf16>
    %cst_11 = arith.constant dense<0.000000e+00> : vector<2x8x32xf32>
    %10 = tpu.matmul %0, %9, %cst_11 {dimension_numbers = #tpu.dot_dimension_numbers<[2], [0], [0, 1], [1], [0, 0, 0, 1, 1, 1], [], []>} : vector<2x8x32xbf16>, vector<32x32xbf16>, vector<2x8x32xf32> -> vector<2x8x32xf32>
    %11 = arith.truncf %10 : vector<2x8x32xf32> to vector<2x8x32xbf16>
    %cst_12 = arith.constant dense<0.000000e+00> : vector<2x8x8xf32>
    %12 = tpu.matmul %11, %0, %cst_12 {dimension_numbers = #tpu.dot_dimension_numbers<[2], [2], [1], [1], [0, 0, 0, 1, 1, 1], [0], [0]>} : vector<2x8x32xbf16>, vector<2x8x32xbf16>, vector<2x8x8xf32> -> vector<2x8x8xf32>
    %c0_13 = arith.constant 0 : index
    %c0_14 = arith.constant 0 : index
    %c0_15 = arith.constant 0 : index
    %13 = vector.load %arg6[%c0_13, %c0_14, %c0_15] : memref<2x8x8xf32, #tpu.memory_space<vmem>>, vector<2x8x8xf32>
    tpu.vector_store %arg6[%c0_13, %c0_14, %c0_15], %12 {strides = array<i32>} : memref<2x8x8xf32, #tpu.memory_space<vmem>>, vector<2x8x8xf32>,
    return
  }
  func.func @transform_0(%arg0: i32) -> (i32, i32, i32) {
    %c0_i32 = arith.constant 0 : i32
    %c0_i32_0 = arith.constant 0 : i32
    %c0_i32_1 = arith.constant 0 : i32
    return %arg0, %c0_i32, %c0_i32_0 : i32, i32, i32
  }
  func.func @transform_1(%arg0: i32) -> (i32, i32) {
    %c0_i32 = arith.constant 0 : i32
    %c0_i32_0 = arith.constant 0 : i32
    %c0_i32_1 = arith.constant 0 : i32
    return %c0_i32, %c0_i32_0 : i32, i32
  }
  func.func @transform_2(%arg0: i32) -> (i32, i32) {
    %c0_i32 = arith.constant 0 : i32
    %c0_i32_0 = arith.constant 0 : i32
    %c0_i32_1 = arith.constant 0 : i32
    return %c0_i32, %c0_i32_0 : i32, i32
  }
  func.func @transform_3(%arg0: i32) -> (i32, i32) {
    %c0_i32 = arith.constant 0 : i32
    %c0_i32_0 = arith.constant 0 : i32
    %c0_i32_1 = arith.constant 0 : i32
    return %c0_i32, %c0_i32_0 : i32, i32
  }
  func.func @transform_4(%arg0: i32) -> (i32, i32, i32) {
    %c0_i32 = arith.constant 0 : i32
    %c0_i32_0 = arith.constant 0 : i32
    %c0_i32_1 = arith.constant 0 : i32
    return %arg0, %c0_i32, %c0_i32_0 : i32, i32, i32
  }
  func.func @transform_5(%arg0: i32) -> (i32, i32, i32) {
    %c0_i32 = arith.constant 0 : i32
    %c0_i32_0 = arith.constant 0 : i32
    %c0_i32_1 = arith.constant 0 : i32
    return %arg0, %c0_i32, %c0_i32_0 : i32, i32, i32
  }
}

</mosaic_0001>

<llo_original>
// kernel: tpu_custom_call.1
$region0: #{tpu_custom_call.1}
  #allocation0 [shape = 'u32[]', space=smem, size = 0x4, offset = 0x4, fixed_abs, tag = 'smem constant byte address 0x4 - core index']
  #allocation1 [shape = 'u32[144,128]{1,0:T(1,128)}', space=vmem, size = 0x12000, scoped, tag = 'internal scratch']
  %s0 = inlined_call_operand.hbm [shape: bf16[2,8,32], index: 0, kind: input, shape index: {}]
  %s1 = inlined_call_operand.hbm [shape: bf16[32,128], index: 1, kind: input, shape index: {}]
  %s2 = inlined_call_operand.vmem [shape: f32[1,128], index: 2, kind: input, shape index: {}]
  %s3 = inlined_call_operand.hbm [shape: bf16[32,32], index: 3, kind: input, shape index: {}]
  %s4 = inlined_call_operand.hbm [shape: f32[2,8,128], index: 4, kind: output, shape index: {0}]
  %s5 = inlined_call_operand.hbm [shape: f32[2,8,8], index: 5, kind: output, shape index: {1}]
  %6 = xla_tuple %s4, %s5
  %s7 = sld [smem:[#allocation0]]
  $region46: #{tpu_custom_call.1} parent=0
    _
  %s9 = ssub.s32 1, %s7
  %s10 = scalar_select 0, %s9, %s7
  $region1: #{tpu_custom_call.1} parent=0
    #allocation2 [shape = 'u8[4096]{0}', space=vmem, size = 0x1000, scoped, tag = 'input window, operand 0, single buffered']
    #allocation3 [shape = 's32[1]{0}', space=sflag, size = 0x4, scoped, tag = 'scoped memory for tpu_custom_call.1']
    #allocation4 [shape = 's32[1]{0}', space=sflag, size = 0x4, scoped, tag = 'scoped memory for tpu_custom_call.1']
    #allocation5 [shape = 'u8[8192]{0}', space=vmem, size = 0x2000, scoped, tag = 'input window, operand 1, single buffered']
    #allocation6 [shape = 's32[1]{0}', space=sflag, size = 0x4, scoped, tag = 'scoped memory for tpu_custom_call.1']
    #allocation7 [shape = 'u8[8192]{0}', space=vmem, size = 0x2000, scoped, tag = 'input window, operand 3, single buffered']
    #allocation8 [shape = 'u8[8192]{0}', space=vmem, size = 0x2000, scoped, tag = 'output window, operand 0, single buffered']
    #allocation9 [shape = 'u8[8192]{0}', space=vmem, size = 0x2000, scoped, tag = 'output window, operand 1, single buffered']
    #allocation10 [shape = 's32[1]{0}', space=sflag, size = 0x4, scoped, tag = 'scoped memory for tpu_custom_call.1']
    %11 = vsyncpa [#allocation3], 0
    %12 = vsyncpa [#allocation6], 0
    %13 = vsyncpa [#allocation4], 0
    %14 = vsyncpa [#allocation10], 0
    // Predicated region
    $region2: #{tpu_custom_call.1} parent=1 // pred_check
      _
    $region3: #{tpu_custom_call.1} parent=1 // pred_check_branch
      %16 = sbr.rel (0) target = $region5
    $region4: #{tpu_custom_call.1} parent=1 // pred_region
      %s18 = ssub.s32 128, 128
      %19 = vsyncadd [#allocation3], %s18
      %s20 = sshll.u32 [#allocation2], 4
      %s21 = int_to_ptr.vmem [resolvable:$true] %s20
      %26 = dma.hbm_to_vmem [thread:$0]  %s0, 128, %s21, [#allocation3], 64, 64, 4
    $region5: #{tpu_custom_call.1} parent=1 // pred_fallthru
      _
    // Predicated region
    $region6: #{tpu_custom_call.1} parent=1 // pred_check
      _
    $region7: #{tpu_custom_call.1} parent=1 // pred_check_branch
      %28 = sbr.rel (0) target = $region9
    $region8: #{tpu_custom_call.1} parent=1 // pred_region
      %s30 = ssub.s32 256, 256
      %31 = vsyncadd [#allocation6], %s30
      %s32 = sshll.u32 [#allocation5], 4
      %s33 = int_to_ptr.vmem [resolvable:$true] %s32
      %38 = dma.hbm_to_vmem [thread:$0]  %s1, 256, %s33, [#allocation6], 64, 64, 4
    $region9: #{tpu_custom_call.1} parent=1 // pred_fallthru
      _
    // Predicated region
    $region10: #{tpu_custom_call.1} parent=1 // pred_check
      _
    $region11: #{tpu_custom_call.1} parent=1 // pred_check_branch
      %40 = sbr.rel (0) target = $region13
    $region12: #{tpu_custom_call.1} parent=1 // pred_region
      _
    $region13: #{tpu_custom_call.1} parent=1 // pred_fallthru
      _
    // Predicated region
    $region14: #{tpu_custom_call.1} parent=1 // pred_check
      _
    $region15: #{tpu_custom_call.1} parent=1 // pred_check_branch
      %42 = sbr.rel (0) target = $region17
    $region16: #{tpu_custom_call.1} parent=1 // pred_region
      %s44 = ssub.s32 256, 256
      %45 = vsyncadd [#allocation6], %s44
      %s46 = sshll.u32 [#allocation7], 4
      %s47 = int_to_ptr.vmem [resolvable:$true] %s46
      %52 = dma.hbm_to_vmem [thread:$0]  %s3, 256, %s47, [#allocation6], 64, 64, 4
    $region17: #{tpu_custom_call.1} parent=1 // pred_fallthru
      _
    // Predicated region
    $region18: #{tpu_custom_call.1} parent=1 // pred_check
      _
    $region19: #{tpu_custom_call.1} parent=1 // pred_check_branch
      %54 = sbr.rel (0) target = $region21
    $region20: #{tpu_custom_call.1} parent=1 // pred_region
      %55 = dma.done [#allocation3], 128
    $region21: #{tpu_custom_call.1} parent=1 // pred_fallthru
      _
    // Predicated region
    $region22: #{tpu_custom_call.1} parent=1 // pred_check
      _
    $region23: #{tpu_custom_call.1} parent=1 // pred_check_branch
      %57 = sbr.rel (0) target = $region25
    $region24: #{tpu_custom_call.1} parent=1 // pred_region
      %58 = dma.done [#allocation6], 256
    $region25: #{tpu_custom_call.1} parent=1 // pred_fallthru
      _
    // Predicated region
    $region26: #{tpu_custom_call.1} parent=1 // pred_check
      _
    $region27: #{tpu_custom_call.1} parent=1 // pred_check_branch
      %60 = sbr.rel (0) target = $region29
    $region28: #{tpu_custom_call.1} parent=1 // pred_region
      %61 = dma.done [#allocation6], 256
    $region29: #{tpu_custom_call.1} parent=1 // pred_fallthru
      _
    %v63 = vld [vmem:[#allocation2] sm:$0xf]
    %v64 = vld [vmem:[#allocation2 + $0x4] sm:$0xf]
    %v65 = vld [vmem:[#allocation5] sm:$0xf]
    %v66 = vld [vmem:[#allocation5 + $0x4] sm:$0xf]
    %v67 = vld [vmem:[#allocation5 + $0x8] sm:$0xf]
    %v68 = vld [vmem:[#allocation5 + $0xc] sm:$0xf]
    %v69 = vld [vmem:[%s2] sm:$0x1]
    %v71 = vlaneseq
    %v72 = vshrl.u32 %v71, 7
    %v73 = vsub.s32 0, %v72
    %v74 = vrot.slane %v69, %v73
    %v78 = vunpack.c.l.b16 %v63
    %v79 = vunpack.c.l.b16 %v64
    %v80 = vpack.c.b16 %v79, %v78
    %v85 = vunpack.c.l.b16 %v65
    %v86 = vunpack.c.l.b16 %v66
    %v87 = vunpack.c.l.b16 %v67
    %v88 = vunpack.c.l.b16 %v68
    %v89 = vpack.c.b16 %v86, %v85
    %v90 = vpack.c.b16 %v88, %v87
    %vm93 = vcmask 261120
    %v95 = vsel %vm93, %v80, 0
    %97 = vmatprep.subr.bf16.mxu0 0
    %98 = vmatpush1.bf16.msra.mxu0 %v89
    %99 = vmatprep.subr.bf16.mxu0 0
    %100 = vmatpush1.bf16.msra.mxu0 %v90
    %101 = vmatprep.subr.bf16.mxu0 0
    %102 = vmatpush1.bf16.msra.mxu0 0
    %103 = vmatprep.subr.bf16.mxu0 0
    %104 = vmatpush1.bf16.msra.mxu0 0
    %105 = vmatprep.subr.bf16.mxu0 0
    %106 = vmatpush1.bf16.msra.mxu0 0
    %107 = vmatprep.subr.bf16.mxu0 0
    %108 = vmatpush1.bf16.msra.mxu0 0
    %109 = vmatprep.subr.bf16.mxu0 0
    %110 = vmatpush1.bf16.msra.mxu0 0
    %111 = vmatprep.subr.bf16.mxu0 0
    %112 = vmatpush1.bf16.msra.mxu0 0
    %113 = vmatprep.subr.bf16.mxu0 0
    %114 = vmatpush1.bf16.msra.mxu0 0
    %115 = vmatprep.subr.bf16.mxu0 0
    %116 = vmatpush1.bf16.msra.mxu0 0
    %117 = vmatprep.subr.bf16.mxu0 0
    %118 = vmatpush1.bf16.msra.mxu0 0
    %119 = vmatprep.subr.bf16.mxu0 0
    %120 = vmatpush1.bf16.msra.mxu0 0
    %121 = vmatprep.subr.bf16.mxu0 0
    %122 = vmatpush1.bf16.msra.mxu0 0
    %123 = vmatprep.subr.bf16.mxu0 0
    %124 = vmatpush1.bf16.msra.mxu0 0
    %125 = vmatprep.subr.bf16.mxu0 0
    %126 = vmatpush1.bf16.msra.mxu0 0
    %127 = vmatprep.subr.bf16.mxu0 0
    %128 = vmatpush1.bf16.msra.mxu0 0
    %129 = vmatprep.mubr.bf16.mxu0 0
    %130 = vmatmul.mubr.bf16.gmra.mrb[0].mxu0 %v95
    %v131 = vpop.f32.mrb[0].mxu0
    %v132 = vadd.f32 %v74, %v131
    %v133 = vpop.f32.mrb[0].mxu0
    %v134 = vpop.f32.mrb[0].mxu0
    %v135 = vadd.f32 %v74, %v134
    %v136 = vpop.f32.mrb[0].mxu0
    %137 = vdwg.mxu0
    %138 = vst [vmem:[#allocation8] sm:$0xff] %v132
    %139 = vst [vmem:[#allocation8 + $0x8] sm:$0xff] %v135
    %v140 = vld [vmem:[#allocation7] sm:$0xf]
    %v141 = vld [vmem:[#allocation7 + $0x4] sm:$0xf]
    %v142 = vld [vmem:[#allocation7 + $0x8] sm:$0xf]
    %v143 = vld [vmem:[#allocation7 + $0xc] sm:$0xf]
    %v148 = vunpack.c.l.b16 %v140
    %v149 = vunpack.c.l.b16 %v141
    %v150 = vunpack.c.l.b16 %v142
    %v151 = vunpack.c.l.b16 %v143
    %v152 = vpack.c.b16 %v149, %v148
    %v153 = vpack.c.b16 %v151, %v150
    %156 = vmatprep.subr.bf16.mxu0 0
    %157 = vmatpush1.bf16.msra.mxu0 %v152
    %158 = vmatprep.subr.bf16.mxu0 0
    %159 = vmatpush1.bf16.msra.mxu0 %v153
    %160 = vmatprep.subr.bf16.mxu0 0
    %161 = vmatpush1.bf16.msra.mxu0 0
    %162 = vmatprep.subr.bf16.mxu0 0
    %163 = vmatpush1.bf16.msra.mxu0 0
    %164 = vmatprep.subr.bf16.mxu0 0
    %165 = vmatpush1.bf16.msra.mxu0 0
    %166 = vmatprep.subr.bf16.mxu0 0
    %167 = vmatpush1.bf16.msra.mxu0 0
    %168 = vmatprep.subr.bf16.mxu0 0
    %169 = vmatpush1.bf16.msra.mxu0 0
    %170 = vmatprep.subr.bf16.mxu0 0
    %171 = vmatpush1.bf16.msra.mxu0 0
    %172 = vmatprep.subr.bf16.mxu0 0
    %173 = vmatpush1.bf16.msra.mxu0 0
    %174 = vmatprep.subr.bf16.mxu0 0
    %175 = vmatpush1.bf16.msra.mxu0 0
    %176 = vmatprep.subr.bf16.mxu0 0
    %177 = vmatpush1.bf16.msra.mxu0 0
    %178 = vmatprep.subr.bf16.mxu0 0
    %179 = vmatpush1.bf16.msra.mxu0 0
    %180 = vmatprep.subr.bf16.mxu0 0
    %181 = vmatpush1.bf16.msra.mxu0 0
    %182 = vmatprep.subr.bf16.mxu0 0
    %183 = vmatpush1.bf16.msra.mxu0 0
    %184 = vmatprep.subr.bf16.mxu0 0
    %185 = vmatpush1.bf16.msra.mxu0 0
    %186 = vmatprep.subr.bf16.mxu0 0
    %187 = vmatpush1.bf16.msra.mxu0 0
    %188 = vmatprep.mubr.bf16.mxu0 0
    %189 = vmatmul.mubr.bf16.gmra.mrb[0].mxu0 %v95
    %v190 = vpop.f32.mrb[0].mxu0
    %v191 = vadd.f32 0.0, %v190
    %v192 = vpop.f32.mrb[0].mxu0
    %v193 = vpop.f32.mrb[0].mxu0
    %v194 = vadd.f32 0.0, %v193
    %v195 = vpop.f32.mrb[0].mxu0
    %196 = vdwg.mxu0
    %v197 = vpack.c.bf16 %v191, %v191
    %v198 = vpack.c.bf16 %v194, %v194
    %v200 = vsel %vm93, %v197, 0
    %v203 = vsel %vm93, %v63, 0
    %205 = vmatprep.subr.bf16.mxu0 0
    %206 = vmatpush1.bf16.xpose.msra.mxu0 %v203
    %207 = vmatprep.subr.bf16.mxu0 0
    %208 = vmatpush1.bf16.xpose.msra.mxu0 0
    %209 = vmatprep.subr.bf16.mxu0 0
    %210 = vmatpush1.bf16.xpose.msra.mxu0 0
    %211 = vmatprep.subr.bf16.mxu0 0
    %212 = vmatpush1.bf16.xpose.msra.mxu0 0
    %213 = vmatprep.subr.bf16.mxu0 0
    %214 = vmatpush1.bf16.xpose.msra.mxu0 0
    %215 = vmatprep.subr.bf16.mxu0 0
    %216 = vmatpush1.bf16.xpose.msra.mxu0 0
    %217 = vmatprep.subr.bf16.mxu0 0
    %218 = vmatpush1.bf16.xpose.msra.mxu0 0
    %219 = vmatprep.subr.bf16.mxu0 0
    %220 = vmatpush1.bf16.xpose.msra.mxu0 0
    %221 = vmatprep.subr.bf16.mxu0 0
    %222 = vmatpush1.bf16.xpose.msra.mxu0 0
    %223 = vmatprep.subr.bf16.mxu0 0
    %224 = vmatpush1.bf16.xpose.msra.mxu0 0
    %225 = vmatprep.subr.bf16.mxu0 0
    %226 = vmatpush1.bf16.xpose.msra.mxu0 0
    %227 = vmatprep.subr.bf16.mxu0 0
    %228 = vmatpush1.bf16.xpose.msra.mxu0 0
    %229 = vmatprep.subr.bf16.mxu0 0
    %230 = vmatpush1.bf16.xpose.msra.mxu0 0
    %231 = vmatprep.subr.bf16.mxu0 0
    %232 = vmatpush1.bf16.xpose.msra.mxu0 0
    %233 = vmatprep.subr.bf16.mxu0 0
    %234 = vmatpush1.bf16.xpose.msra.mxu0 0
    %235 = vmatprep.subr.bf16.mxu0 0
    %236 = vmatpush1.bf16.xpose.msra.mxu0 0
    %237 = vmatprep.mubr.bf16.mxu0 0
    %238 = vmatmul.mubr.bf16.gmra.mrb[0].mxu0 %v200
    %v239 = vpop.f32.mrb[0].mxu0
    %v240 = vadd.f32 0.0, %v239
    %v241 = vpop.f32.mrb[0].mxu0
    %v242 = vpop.f32.mrb[0].mxu0
    %v243 = vpop.f32.mrb[0].mxu0
    %244 = vdwg.mxu0
    %v246 = vsel %vm93, %v198, 0
    %v249 = vsel %vm93, %v64, 0
    %251 = vmatprep.subr.bf16.mxu0 0
    %252 = vmatpush1.bf16.xpose.msra.mxu0 %v249
    %253 = vmatprep.subr.bf16.mxu0 0
    %254 = vmatpush1.bf16.xpose.msra.mxu0 0
    %255 = vmatprep.subr.bf16.mxu0 0
    %256 = vmatpush1.bf16.xpose.msra.mxu0 0
    %257 = vmatprep.subr.bf16.mxu0 0
    %258 = vmatpush1.bf16.xpose.msra.mxu0 0
    %259 = vmatprep.subr.bf16.mxu0 0
    %260 = vmatpush1.bf16.xpose.msra.mxu0 0
    %261 = vmatprep.subr.bf16.mxu0 0
    %262 = vmatpush1.bf16.xpose.msra.mxu0 0
    %263 = vmatprep.subr.bf16.mxu0 0
    %264 = vmatpush1.bf16.xpose.msra.mxu0 0
    %265 = vmatprep.subr.bf16.mxu0 0
    %266 = vmatpush1.bf16.xpose.msra.mxu0 0
    %267 = vmatprep.subr.bf16.mxu0 0
    %268 = vmatpush1.bf16.xpose.msra.mxu0 0
    %269 = vmatprep.subr.bf16.mxu0 0
    %270 = vmatpush1.bf16.xpose.msra.mxu0 0
    %271 = vmatprep.subr.bf16.mxu0 0
    %272 = vmatpush1.bf16.xpose.msra.mxu0 0
    %273 = vmatprep.subr.bf16.mxu0 0
    %274 = vmatpush1.bf16.xpose.msra.mxu0 0
    %275 = vmatprep.subr.bf16.mxu0 0
    %276 = vmatpush1.bf16.xpose.msra.mxu0 0
    %277 = vmatprep.subr.bf16.mxu0 0
    %278 = vmatpush1.bf16.xpose.msra.mxu0 0
    %279 = vmatprep.subr.bf16.mxu0 0
    %280 = vmatpush1.bf16.xpose.msra.mxu0 0
    %281 = vmatprep.subr.bf16.mxu0 0
    %282 = vmatpush1.bf16.xpose.msra.mxu0 0
    %283 = vmatprep.mubr.bf16.mxu0 0
    %284 = vmatmul.mubr.bf16.gmra.mrb[0].mxu0 %v246
    %v285 = vpop.f32.mrb[0].mxu0
    %v286 = vadd.f32 0.0, %v285
    %v287 = vpop.f32.mrb[0].mxu0
    %v288 = vpop.f32.mrb[0].mxu0
    %v289 = vpop.f32.mrb[0].mxu0
    %290 = vdwg.mxu0
    %vm291 = vcmask 64512
    %292 = vst.msk [vmem:[#allocation9] sm:$0xff] %vm291, %v240
    %293 = vst.msk [vmem:[#allocation9 + $0x8] sm:$0xff] %vm291, %v286
    // Predicated region
    $region30: #{tpu_custom_call.1} parent=1 // pred_check
      _
    $region31: #{tpu_custom_call.1} parent=1 // pred_check_branch
      %295 = sbr.rel (0) target = $region33
    $region32: #{tpu_custom_call.1} parent=1 // pred_region
      %s297 = ssub.s32 256, 256
      %298 = vsyncadd [#allocation4], %s297
      %s299 = sshll.u32 [#allocation8], 4
      %s300 = int_to_ptr.vmem [resolvable:$true] %s299
      %305 = dma.vmem_to_hbm [thread:$0]  %s300, 256, %s4, [#allocation4], 128, 128, 8
    $region33: #{tpu_custom_call.1} parent=1 // pred_fallthru
      _
    // Predicated region
    $region34: #{tpu_custom_call.1} parent=1 // pred_check
      _
    $region35: #{tpu_custom_call.1} parent=1 // pred_check_branch
      %307 = sbr.rel (0) target = $region37
    $region36: #{tpu_custom_call.1} parent=1 // pred_region
      %s309 = ssub.s32 256, 256
      %310 = vsyncadd [#allocation10], %s309
      %s311 = sshll.u32 [#allocation9], 4
      %s312 = int_to_ptr.vmem [resolvable:$true] %s311
      %317 = dma.vmem_to_hbm [thread:$0]  %s312, 256, %s5, [#allocation10], 128, 128, 8
    $region37: #{tpu_custom_call.1} parent=1 // pred_fallthru
      _
    // Predicated region
    $region38: #{tpu_custom_call.1} parent=1 // pred_check
      _
    $region39: #{tpu_custom_call.1} parent=1 // pred_check_branch
      %319 = sbr.rel (0) target = $region41
    $region40: #{tpu_custom_call.1} parent=1 // pred_region
      %320 = dma.done [#allocation4], 256
    $region41: #{tpu_custom_call.1} parent=1 // pred_fallthru
      _
    // Predicated region
    $region42: #{tpu_custom_call.1} parent=1 // pred_check
      _
    $region43: #{tpu_custom_call.1} parent=1 // pred_check_branch
      %322 = sbr.rel (0) target = $region45
    $region44: #{tpu_custom_call.1} parent=1 // pred_region
      %323 = dma.done [#allocation10], 256
    $region45: #{tpu_custom_call.1} parent=1 // pred_fallthru
      _
    %324 = vsyncpa [#allocation3], 1
    %325 = vsyncpa [#allocation6], 1
    %326 = vsyncpa [#allocation4], 1
    %327 = vsyncpa [#allocation10], 1

</llo_original>
